<compile_context>
chip_gen: v5e
topology: v5e:2x2
jax: 0.10.0
libtpu: 0.0.40
codegen_flags: <defaults>
</compile_context>

<pallas_src>
import functools
import math

import jax
import jax.numpy as jnp
from jax.experimental import pallas as pl
from jax.experimental.pallas import tpu as pltpu


LANE = 128  # every packed operand / output is one 128-lane vreg row wide


# ----------------------------------------------------------------------------
# Pallas kernel: fused DDPM add_noise + sinusoidal temb + 3-layer MLP
# ----------------------------------------------------------------------------
def actor_forward_kernel(
    base_ref,    # VMEM (tb, 128) f32  [action(A) | features(F) | 0(E) | 0 pad]
    noise_ref,   # VMEM (tb, 128) f32  [gaussian noise(A) | zeros]
    scal_ref,    # VMEM (tb, 128) f32  lane0 sqrt(acp[t]), lane1 sqrt(1-acp[t]),
                 #                     lane2 t (float), rest zero
    const_ref,   # VMEM (2, 128)  f32  row0 temb freqs, row1 temb phase
                 #                     (nonzero only on the temb lane range)
    w1_ref,      # VMEM (128, 128) bf16  (valid block [0:D1, 0:H], rest zero)
    w2_ref,      # VMEM (128, 128) bf16  (valid block [0:H, 0:H])
    w3_ref,      # VMEM (128, 128) bf16  (valid block [0:H, 0:A])
    b_ref,       # VMEM (3, 128)  f32   rows: b1, b2, b3 (b3 valid in [:A])
    out_ref,     # VMEM (tb, 128) f32   out: predicted noise in lanes [0:A]
    *,
    act_width: int,
):
    D1 = base_ref.shape[1]
    A = act_width

    # per-row scheduler coefficients and timestep (lane-dense load, static slices)
    sa = scal_ref[:, 0:1]      # sqrt(alpha_cumprod[t])        (tb, 1)
    soma = scal_ref[:, 1:2]    # sqrt(1 - alpha_cumprod[t])    (tb, 1)
    t_f = scal_ref[:, 2:3]     # timestep as float             (tb, 1)

    # sinusoidal timestep embedding as a single phased sin:
    # freqs/phase are zero outside the temb lane range, so sin(0)=0 there.
    temb = jnp.sin(t_f * const_ref[0:1, :] + const_ref[1:2, :])          # (tb, D1)

    # fused DDPM add_noise on the action lanes, passthrough on feature lanes,
    # embedding on the temb lanes (noise/base are zero outside their ranges).
    lane = jax.lax.broadcasted_iota(jnp.int32, (1, D1), 1)
    is_act = lane < A
    x1 = (jnp.where(is_act, sa, 1.0) * base_ref[...]
          + soma * noise_ref[...]
          + temb)                                                        # (tb, D1)

    # 3-layer MLP: bf16 MXU matmuls, f32 accumulation + element-wise.
    mm = w1_ref.dtype
    h1 = jnp.dot(x1.astype(mm), w1_ref[...], preferred_element_type=jnp.float32)
    h1 = jnp.maximum(h1 + b_ref[0:1, :], 0.0)
    h2 = jnp.dot(h1.astype(mm), w2_ref[...], preferred_element_type=jnp.float32)
    h2 = jnp.maximum(h2 + b_ref[1:2, :], 0.0)
    out = jnp.dot(h2.astype(mm), w3_ref[...], preferred_element_type=jnp.float32)
    # w3 columns >= A and b3 lanes >= A are zero -> lanes >= A of the slab are 0.
    out_ref[...] = out + b_ref[2:3, :]


# ----------------------------------------------------------------------------
# Wrapper: parameter / constant setup (one-time) + jitted forward
# ----------------------------------------------------------------------------
class DiffusionActorPallas:
    def __init__(self, seq_len=8, action_dim=4, low_dim=16, view_feat_dim=16,
                 hidden=64, temb_dim=32, num_train_timesteps=100,
                 num_diffusion_iters=16, param_seed=0,
                 matmul_dtype=jnp.bfloat16, batch_tile=256):
        assert temb_dim % 2 == 0
        self.seq_len = seq_len
        self.action_dim = action_dim
        self.flat_action = seq_len * action_dim
        self.feat_dim = low_dim + view_feat_dim
        self.hidden = hidden
        self.temb_dim = temb_dim
        self.num_train_timesteps = num_train_timesteps
        self.num_diffusion_iters = num_diffusion_iters
        self.batch_tile = batch_tile

        A, F_, E, H = self.flat_action, self.feat_dim, temb_dim, hidden
        T = num_train_timesteps
        D1 = A + F_ + E
        assert D1 <= LANE, "packing assumes action+features+temb fit one vreg row"
        assert H <= LANE and A <= LANE
        self.in_dim = D1

        # --- DDPM scheduler tables (linear beta schedule) ----------------------
        betas = jnp.linspace(1e-4, 0.02, T, dtype=jnp.float32)
        acp = jnp.cumprod(1.0 - betas)
        self.sqrt_acp = jnp.sqrt(acp)                 # (T,)
        self.sqrt_1macp = jnp.sqrt(1.0 - acp)         # (T,)

        # --- sinusoidal-embedding constants ([sin | cos] via one phased sin) ---
        # TODO(synk): diffusers' flip_sin_to_cos / downscale_freq_shift flags are
        # config dependent; [sin, cos] with shift 0 is used here.
        half = E // 2
        freqs = jnp.exp(-math.log(10000.0)
                        * jnp.arange(half, dtype=jnp.float32) / half)
        freqs_full = jnp.concatenate([freqs, freqs])
        phase_full = jnp.concatenate(
            [jnp.zeros((half,), jnp.float32),
             jnp.full((half,), math.pi / 2.0, jnp.float32)])
        const = jnp.zeros((2, LANE), jnp.float32)
        const = const.at[0, A + F_:A + F_ + E].set(freqs_full)
        const = const.at[1, A + F_:A + F_ + E].set(phase_full)
        self.const = const

        # --- MLP parameters, zero-padded to lane-dense (128, 128) blocks -------
        key = jax.random.PRNGKey(param_seed)
        k1, k2, k3 = jax.random.split(key, 3)

        def init(k, rows, cols, fan_in):
            w = (jax.random.normal(k, (rows, cols), jnp.float32)
                 / math.sqrt(fan_in))
            full = jnp.zeros((LANE, LANE), jnp.float32).at[:rows, :cols].set(w)
            return full.astype(matmul_dtype)

        self.w1 = init(k1, D1, H, D1)      # padded rows see zero input lanes
        self.w2 = init(k2, H, H, H)
        self.w3 = init(k3, H, A, H)
        self.biases = jnp.zeros((3, LANE), jnp.float32)   # rows b1, b2, b3(:A)

        # one dispatch for glue ops + pallas_call
        self.forward = jax.jit(self._forward)

    # -------------------------------------------------------------------------
    def _forward(self, key, low_dim_obs, fused_view_feats, action):
        A = self.flat_action
        F_ = self.feat_dim
        T = self.num_train_timesteps

        # _combine
        feats = []
        if low_dim_obs is not None:
            feats.append(low_dim_obs)
        if fused_view_feats is not None:
            feats.append(fused_view_feats)
        obs_features = jnp.concatenate(feats, axis=-1).astype(jnp.float32)
        b = obs_features.shape[0]
        action_flat = action.reshape(b, A).astype(jnp.float32)

        # RNG + scheduler-coefficient gather in the jitted wrapper.
        # TODO(synk): switch to in-kernel pltpu.prng_* on TPU-only deployments.
        k_noise, k_t = jax.random.split(key)
        noise = jax.random.normal(k_noise, (b, A), jnp.float32)
        t = jax.random.randint(k_t, (b,), 0, T)
        sa = jnp.take(self.sqrt_acp, t)        # (b,)
        soma = jnp.take(self.sqrt_1macp, t)    # (b,)

        # batch padding / tiling (>=8 sublane rows; tile large batches over grid)
        if b >= self.batch_tile:
            tile_b = self.batch_tile
        else:
            tile_b = -(-b // 8) * 8
        b_pad = -(-b // tile_b) * tile_b
        pad = b_pad - b

        # lane-dense packed operands
        base = jnp.concatenate(
            [action_flat, obs_features,
             jnp.zeros((b, LANE - A - F_), jnp.float32)], axis=-1)       # (b, 128)
        noise_pad = jnp.concatenate(
            [noise, jnp.zeros((b, LANE - A), jnp.float32)], axis=-1)     # (b, 128)
        scal = jnp.zeros((b, LANE), jnp.float32)
        scal = scal.at[:, 0].set(sa)
        scal = scal.at[:, 1].set(soma)
        scal = scal.at[:, 2].set(t.astype(jnp.float32))
        if pad:
            zrow = jnp.zeros((pad, LANE), jnp.float32)
            base = jnp.concatenate([base, zrow], axis=0)
            noise_pad = jnp.concatenate([noise_pad, zrow], axis=0)
            scal = jnp.concatenate([scal, zrow], axis=0)

        row_spec = pl.BlockSpec((tile_b, LANE), lambda i: (i, 0))
        const_spec = pl.BlockSpec((2, LANE), lambda i: (0, 0))
        bias_spec = pl.BlockSpec((3, LANE), lambda i: (0, 0))
        w_spec = pl.BlockSpec((LANE, LANE), lambda i: (0, 0))

        flops = 2 * b_pad * (3 * LANE * LANE)
        bytes_accessed = int(4 * LANE * (4 * b_pad + 3 * LANE + 5))
        cost = pl.CostEstimate(flops=int(flops),
                               transcendentals=int(b_pad * LANE),
                               bytes_accessed=bytes_accessed)

        kernel = functools.partial(actor_forward_kernel, act_width=A)

        out = pl.pallas_call(
            kernel,
            grid=(b_pad // tile_b,),
            in_specs=[row_spec, row_spec, row_spec, const_spec,
                      w_spec, w_spec, w_spec, bias_spec],
            out_specs=pl.BlockSpec((tile_b, LANE), lambda i: (i, 0)),
            out_shape=jax.ShapeDtypeStruct((b_pad, LANE), jnp.float32),
            compiler_params=pltpu.CompilerParams(
                dimension_semantics=("parallel",)),
            cost_estimate=cost,
        )(base, noise_pad, scal, self.const,
          self.w1, self.w2, self.w3, self.biases)

        noise_pred = out[:b, :A].reshape(b, self.seq_len, self.action_dim)
        noise_out = noise.reshape(b, self.seq_len, self.action_dim)
        return noise_pred, noise_out


# ----------------------------------------------------------------------------
if __name__ == "__main__":
    B, SEQ, ADIM, LOW, VIEW = 2, 8, 4, 16, 16

    actor = DiffusionActorPallas(
        seq_len=SEQ, action_dim=ADIM, low_dim=LOW, view_feat_dim=VIEW,
        hidden=64, temb_dim=32, num_train_timesteps=100,
        num_diffusion_iters=16, param_seed=0,
    )

    root = jax.random.PRNGKey(0)
    k_low, k_view, k_act, k_fwd = jax.random.split(root, 4)
    low_dim_obs = jax.random.normal(k_low, (B, LOW), jnp.float32)
    fused_view_feats = jax.random.normal(k_view, (B, VIEW), jnp.float32)
    action = jax.random.normal(k_act, (B, SEQ, ADIM), jnp.float32)

    noise_pred, noise = actor.forward(k_fwd, low_dim_obs, fused_view_feats, action)
    jax.block_until_ready((noise_pred, noise))

    assert noise_pred.shape == (B, SEQ, ADIM)
    assert noise.shape == (B, SEQ, ADIM)
    assert bool(jnp.all(jnp.isfinite(noise_pred)))
    assert bool(jnp.all(jnp.isfinite(noise)))
    print("KERNEL_OK")
</pallas_src>

<mosaic_0001>
module attributes {stable_mosaic.version = 11 : i64} {
  func.func @actor_forward_kernel(%arg0: i32, %arg1: memref<8x128xf32, #tpu.memory_space<vmem>>, %arg2: memref<8x128xf32, #tpu.memory_space<vmem>>, %arg3: memref<8x128xf32, #tpu.memory_space<vmem>>, %arg4: memref<2x128xf32, #tpu.memory_space<vmem>>, %arg5: memref<128x128xbf16, #tpu.memory_space<vmem>>, %arg6: memref<128x128xbf16, #tpu.memory_space<vmem>>, %arg7: memref<128x128xbf16, #tpu.memory_space<vmem>>, %arg8: memref<3x128xf32, #tpu.memory_space<vmem>>, %arg9: memref<8x128xf32, #tpu.memory_space<vmem>>) attributes {dimension_semantics = [#tpu.dimension_semantics<parallel>], iteration_bounds = array<i64: 1>, scalar_prefetch = 0 : i64, scratch_operands = 0 : i64, tpu.core_type = #tpu.core_type<tc>, window_params = [{transform_indices = @transform_0, window_bounds = array<i64: 8, 128>}, {transform_indices = @transform_1, window_bounds = array<i64: 8, 128>}, {transform_indices = @transform_2, window_bounds = array<i64: 8, 128>}, {pipeline_mode = #tpu.pipeline_mode<synchronous>, transform_indices = @transform_3, window_bounds = array<i64: 2, 128>}, {pipeline_mode = #tpu.pipeline_mode<synchronous>, transform_indices = @transform_4, window_bounds = array<i64: 128, 128>}, {pipeline_mode = #tpu.pipeline_mode<synchronous>, transform_indices = @transform_5, window_bounds = array<i64: 128, 128>}, {pipeline_mode = #tpu.pipeline_mode<synchronous>, transform_indices = @transform_6, window_bounds = array<i64: 128, 128>}, {pipeline_mode = #tpu.pipeline_mode<synchronous>, transform_indices = @transform_7, window_bounds = array<i64: 3, 128>}, {transform_indices = @transform_8, window_bounds = array<i64: 8, 128>}]} {
    %c0 = arith.constant 0 : index
    %c0_0 = arith.constant 0 : index
    %0 = vector.load %arg3[%c0, %c0_0] : memref<8x128xf32, #tpu.memory_space<vmem>>, vector<8x1xf32>
    %c0_1 = arith.constant 0 : index
    %c1 = arith.constant 1 : index
    %1 = vector.load %arg3[%c0_1, %c1] : memref<8x128xf32, #tpu.memory_space<vmem>>, vector<8x1xf32>
    %c0_2 = arith.constant 0 : index
    %c2 = arith.constant 2 : index
    %2 = vector.load %arg3[%c0_2, %c2] : memref<8x128xf32, #tpu.memory_space<vmem>>, vector<8x1xf32>
    %c0_3 = arith.constant 0 : index
    %c0_4 = arith.constant 0 : index
    %3 = vector.load %arg4[%c0_3, %c0_4] : memref<2x128xf32, #tpu.memory_space<vmem>>, vector<1x128xf32>
    %4 = vector.broadcast %2 : vector<8x1xf32> to vector<8x128xf32>
    %5 = vector.broadcast %3 : vector<1x128xf32> to vector<8x128xf32>
    %6 = arith.mulf %4, %5 : vector<8x128xf32>
    %c1_5 = arith.constant 1 : index
    %c0_6 = arith.constant 0 : index
    %7 = vector.load %arg4[%c1_5, %c0_6] : memref<2x128xf32, #tpu.memory_space<vmem>>, vector<1x128xf32>
    %8 = vector.broadcast %7 : vector<1x128xf32> to vector<8x128xf32>
    %9 = arith.addf %6, %8 : vector<8x128xf32>
    %10 = math.sin %9 : vector<8x128xf32>
    %11 = tpu.iota {dimensions = array<i32: 1>} : vector<1x128xi32>
    %c32_i32 = arith.constant 32 : i32
    %12 = vector.broadcast %c32_i32 : i32 to vector<1x128xi32>
    %13 = arith.cmpi slt, %11, %12 : vector<1x128xi32>
    %cst = arith.constant 1.000000e+00 : f32
    %14 = vector.shape_cast %13 : vector<1x128xi1> to vector<1x128xi1>
    %15 = vector.broadcast %14 : vector<1x128xi1> to vector<8x128xi1>
    %16 = vector.shape_cast %0 : vector<8x1xf32> to vector<8x1xf32>
    %17 = vector.broadcast %16 : vector<8x1xf32> to vector<8x128xf32>
    %18 = vector.broadcast %cst : f32 to vector<8x128xf32>
    %19 = arith.select %15, %17, %18 : vector<8x128xi1>, vector<8x128xf32>
    %c0_7 = arith.constant 0 : index
    %c0_8 = arith.constant 0 : index
    %20 = vector.load %arg1[%c0_7, %c0_8] : memref<8x128xf32, #tpu.memory_space<vmem>>, vector<8x128xf32>
    %21 = arith.mulf %19, %20 : vector<8x128xf32>
    %c0_9 = arith.constant 0 : index
    %c0_10 = arith.constant 0 : index
    %22 = vector.load %arg2[%c0_9, %c0_10] : memref<8x128xf32, #tpu.memory_space<vmem>>, vector<8x128xf32>
    %23 = vector.broadcast %1 : vector<8x1xf32> to vector<8x128xf32>
    %24 = arith.mulf %23, %22 : vector<8x128xf32>
    %25 = arith.addf %21, %24 : vector<8x128xf32>
    %26 = arith.addf %25, %10 : vector<8x128xf32>
    %27 = arith.truncf %26 : vector<8x128xf32> to vector<8x128xbf16>
    %c0_11 = arith.constant 0 : index
    %c0_12 = arith.constant 0 : index
    %28 = vector.load %arg5[%c0_11, %c0_12] : memref<128x128xbf16, #tpu.memory_space<vmem>>, vector<128x128xbf16>
    %cst_13 = arith.constant dense<0.000000e+00> : vector<8x128xf32>
    %29 = tpu.matmul %27, %28, %cst_13 {dimension_numbers = #tpu.dot_dimension_numbers<[1], [0], [0], [1], [0, 0, 1, 1], [], []>} : vector<8x128xbf16>, vector<128x128xbf16>, vector<8x128xf32> -> vector<8x128xf32>
    %c0_14 = arith.constant 0 : index
    %c0_15 = arith.constant 0 : index
    %30 = vector.load %arg8[%c0_14, %c0_15] : memref<3x128xf32, #tpu.memory_space<vmem>>, vector<1x128xf32>
    %31 = vector.broadcast %30 : vector<1x128xf32> to vector<8x128xf32>
    %32 = arith.addf %29, %31 : vector<8x128xf32>
    %cst_16 = arith.constant 0.000000e+00 : f32
    %33 = vector.broadcast %cst_16 : f32 to vector<8x128xf32>
    %34 = arith.maximumf %32, %33 : vector<8x128xf32>
    %35 = arith.truncf %34 : vector<8x128xf32> to vector<8x128xbf16>
    %c0_17 = arith.constant 0 : index
    %c0_18 = arith.constant 0 : index
    %36 = vector.load %arg6[%c0_17, %c0_18] : memref<128x128xbf16, #tpu.memory_space<vmem>>, vector<128x128xbf16>
    %cst_19 = arith.constant dense<0.000000e+00> : vector<8x128xf32>
    %37 = tpu.matmul %35, %36, %cst_19 {dimension_numbers = #tpu.dot_dimension_numbers<[1], [0], [0], [1], [0, 0, 1, 1], [], []>} : vector<8x128xbf16>, vector<128x128xbf16>, vector<8x128xf32> -> vector<8x128xf32>
    %c1_20 = arith.constant 1 : index
    %c0_21 = arith.constant 0 : index
    %38 = vector.load %arg8[%c1_20, %c0_21] : memref<3x128xf32, #tpu.memory_space<vmem>>, vector<1x128xf32>
    %39 = vector.broadcast %38 : vector<1x128xf32> to vector<8x128xf32>
    %40 = arith.addf %37, %39 : vector<8x128xf32>
    %cst_22 = arith.constant 0.000000e+00 : f32
    %41 = vector.broadcast %cst_22 : f32 to vector<8x128xf32>
    %42 = arith.maximumf %40, %41 : vector<8x128xf32>
    %43 = arith.truncf %42 : vector<8x128xf32> to vector<8x128xbf16>
    %c0_23 = arith.constant 0 : index
    %c0_24 = arith.constant 0 : index
    %44 = vector.load %arg7[%c0_23, %c0_24] : memref<128x128xbf16, #tpu.memory_space<vmem>>, vector<128x128xbf16>
    %cst_25 = arith.constant dense<0.000000e+00> : vector<8x128xf32>
    %45 = tpu.matmul %43, %44, %cst_25 {dimension_numbers = #tpu.dot_dimension_numbers<[1], [0], [0], [1], [0, 0, 1, 1], [], []>} : vector<8x128xbf16>, vector<128x128xbf16>, vector<8x128xf32> -> vector<8x128xf32>
    %c2_26 = arith.constant 2 : index
    %c0_27 = arith.constant 0 : index
    %46 = vector.load %arg8[%c2_26, %c0_27] : memref<3x128xf32, #tpu.memory_space<vmem>>, vector<1x128xf32>
    %47 = vector.broadcast %46 : vector<1x128xf32> to vector<8x128xf32>
    %48 = arith.addf %45, %47 : vector<8x128xf32>
    %c0_28 = arith.constant 0 : index
    %c0_29 = arith.constant 0 : index
    %49 = vector.load %arg9[%c0_28, %c0_29] : memref<8x128xf32, #tpu.memory_space<vmem>>, vector<8x128xf32>
    tpu.vector_store %arg9[%c0_28, %c0_29], %48 {strides = array<i32>} : memref<8x128xf32, #tpu.memory_space<vmem>>, vector<8x128xf32>,
    return
  }
  func.func @transform_0(%arg0: i32) -> (i32, i32) {
    %c0_i32 = arith.constant 0 : i32
    %c0_i32_0 = arith.constant 0 : i32
    return %arg0, %c0_i32 : i32, i32
  }
  func.func @transform_1(%arg0: i32) -> (i32, i32) {
    %c0_i32 = arith.constant 0 : i32
    %c0_i32_0 = arith.constant 0 : i32
    return %arg0, %c0_i32 : i32, i32
  }
  func.func @transform_2(%arg0: i32) -> (i32, i32) {
    %c0_i32 = arith.constant 0 : i32
    %c0_i32_0 = arith.constant 0 : i32
    return %arg0, %c0_i32 : i32, i32
  }
  func.func @transform_3(%arg0: i32) -> (i32, i32) {
    %c0_i32 = arith.constant 0 : i32
    %c0_i32_0 = arith.constant 0 : i32
    %c0_i32_1 = arith.constant 0 : i32
    return %c0_i32, %c0_i32_0 : i32, i32
  }
  func.func @transform_4(%arg0: i32) -> (i32, i32) {
    %c0_i32 = arith.constant 0 : i32
    %c0_i32_0 = arith.constant 0 : i32
    %c0_i32_1 = arith.constant 0 : i32
    return %c0_i32, %c0_i32_0 : i32, i32
  }
  func.func @transform_5(%arg0: i32) -> (i32, i32) {
    %c0_i32 = arith.constant 0 : i32
    %c0_i32_0 = arith.constant 0 : i32
    %c0_i32_1 = arith.constant 0 : i32
    return %c0_i32, %c0_i32_0 : i32, i32
  }
  func.func @transform_6(%arg0: i32) -> (i32, i32) {
    %c0_i32 = arith.constant 0 : i32
    %c0_i32_0 = arith.constant 0 : i32
    %c0_i32_1 = arith.constant 0 : i32
    return %c0_i32, %c0_i32_0 : i32, i32
  }
  func.func @transform_7(%arg0: i32) -> (i32, i32) {
    %c0_i32 = arith.constant 0 : i32
    %c0_i32_0 = arith.constant 0 : i32
    %c0_i32_1 = arith.constant 0 : i32
    return %c0_i32, %c0_i32_0 : i32, i32
  }
  func.func @transform_8(%arg0: i32) -> (i32, i32) {
    %c0_i32 = arith.constant 0 : i32
    %c0_i32_0 = arith.constant 0 : i32
    return %arg0, %c0_i32 : i32, i32
  }
}

</mosaic_0001>

<llo_original>
// kernel: _forward.1
$region0: #{_forward.1}
  #allocation0 [shape = 'u32[]', space=smem, size = 0x4, offset = 0x4, fixed_abs, tag = 'smem constant byte address 0x4 - core index']
  #allocation1 [shape = 'u32[72,128]{1,0:T(1,128)}', space=vmem, size = 0x9000, scoped, tag = 'internal scratch']
  %s0 = inlined_call_operand.vmem [shape: f32[8,128], index: 0, kind: input, shape index: {}]
  %s1 = inlined_call_operand.vmem [shape: f32[8,128], index: 1, kind: input, shape index: {}]
  %s2 = inlined_call_operand.vmem [shape: f32[8,128], index: 2, kind: input, shape index: {}]
  %s3 = inlined_call_operand.vmem [shape: f32[2,128], index: 3, kind: input, shape index: {}]
  %s4 = inlined_call_operand.vmem [shape: bf16[128,128], index: 4, kind: input, shape index: {}]
  %s5 = inlined_call_operand.vmem [shape: bf16[128,128], index: 5, kind: input, shape index: {}]
  %s6 = inlined_call_operand.vmem [shape: bf16[128,128], index: 6, kind: input, shape index: {}]
  %s7 = inlined_call_operand.vmem [shape: f32[3,128], index: 7, kind: input, shape index: {}]
  %s8 = inlined_call_operand.vmem [shape: f32[8,128], index: 8, kind: output, shape index: {}]
  %s9 = sld [smem:[#allocation0]]
  $region42: #{_forward.1} parent=0
    _
  %s11 = ssub.s32 1, %s9
  %s12 = scalar_select 0, %s11, %s9
  // Predicated region
  $region2: #{_forward.1} parent=0 // pred_check
    _
  $region3: #{_forward.1} parent=0 // pred_check_branch
    %14 = sbr.rel (0) target = $region5
  $region4: #{_forward.1} parent=0 // pred_region
    _
  $region5: #{_forward.1} parent=0 // pred_fallthru
    _
  // Predicated region
  $region6: #{_forward.1} parent=0 // pred_check
    _
  $region7: #{_forward.1} parent=0 // pred_check_branch
    %16 = sbr.rel (0) target = $region9
  $region8: #{_forward.1} parent=0 // pred_region
    _
  $region9: #{_forward.1} parent=0 // pred_fallthru
    _
  // Predicated region
  $region10: #{_forward.1} parent=0 // pred_check
    _
  $region11: #{_forward.1} parent=0 // pred_check_branch
    %18 = sbr.rel (0) target = $region13
  $region12: #{_forward.1} parent=0 // pred_region
    _
  $region13: #{_forward.1} parent=0 // pred_fallthru
    _
  // Predicated region
  $region14: #{_forward.1} parent=0 // pred_check
    _
  $region15: #{_forward.1} parent=0 // pred_check_branch
    %20 = sbr.rel (0) target = $region17
  $region16: #{_forward.1} parent=0 // pred_region
    _
  $region17: #{_forward.1} parent=0 // pred_fallthru
    _
  // Predicated region
  $region18: #{_forward.1} parent=0 // pred_check
    _
  $region19: #{_forward.1} parent=0 // pred_check_branch
    %22 = sbr.rel (0) target = $region21
  $region20: #{_forward.1} parent=0 // pred_region
    _
  $region21: #{_forward.1} parent=0 // pred_fallthru
    _
  // Predicated region
  $region22: #{_forward.1} parent=0 // pred_check
    _
  $region23: #{_forward.1} parent=0 // pred_check_branch
    %24 = sbr.rel (0) target = $region25
  $region24: #{_forward.1} parent=0 // pred_region
    _
  $region25: #{_forward.1} parent=0 // pred_fallthru
    _
  // Predicated region
  $region26: #{_forward.1} parent=0 // pred_check
    _
  $region27: #{_forward.1} parent=0 // pred_check_branch
    %26 = sbr.rel (0) target = $region29
  $region28: #{_forward.1} parent=0 // pred_region
    _
  $region29: #{_forward.1} parent=0 // pred_fallthru
    _
  // Predicated region
  $region30: #{_forward.1} parent=0 // pred_check
    _
  $region31: #{_forward.1} parent=0 // pred_check_branch
    %28 = sbr.rel (0) target = $region33
  $region32: #{_forward.1} parent=0 // pred_region
    _
  $region33: #{_forward.1} parent=0 // pred_fallthru
    _
  %v29 = vld [vmem:[%s2] sm:$0xff]
  %v30 = vld [vmem:[%s3] sm:$0x1]
  %32 = vset.pattern.permute.xlu0 2
  %33 = vperm.xlu0 %32, %v29
  %v34 = vpop.permute.xlu0 %33
  %v36 = vperm.slane %v30, 0
  %v37 = vmul.f32 %v34, %v36
  %v38 = vld [vmem:[%s3 + $0x1] sm:$0x1]
  %v39 = vperm.slane %v38, 0
  %v40 = vadd.f32 %v37, %v39
  %v41 = vand.u32 2147483647, %v40
  %vm42 = vcmp.le.f32.partialorder %v41, 0.7853982
  %vm43 = vcmp.lt.s32.totalorder %v40, 0
  %v44 = vand.u32 %v40, 2139095040
  %v45 = vshrl.u32 %v44, 23
  %v46 = vsub.s32 %v45, 127
  %v47 = vand.u32 2147483647, %v40
  %v48 = vand.u32 %v47, 8388607
  %v49 = vor.u32 %v48, 8388608
  %v50 = vsub.s32 0, %v49
  %v51 = vadd.s32 %v46, 1
  %vm52 = vcmp.gt.s32.totalorder %v51, 0
  %v53 = vsel %vm52, %v51, 0
  %v54 = vshrl.u32 %v53, 5
  %v55 = vand.u32 %v53, 31
  %v56 = vsub.s32 32, %v55
  %v57 = vshrl.u32 683565275, %v56
  %v58 = vshll.u32 683565275, %v55
  %v59 = vshrl.u32 2475754826, %v56
  %v60 = vor.u32 %v58, %v59
  %v61 = vshll.u32 2475754826, %v55
  %v62 = vshrl.u32 2131351028, %v56
  %v63 = vor.u32 %v61, %v62
  %v64 = vshll.u32 2131351028, %v55
  %v65 = vshrl.u32 2102212464, %v56
  %v66 = vor.u32 %v64, %v65
  %v67 = vshll.u32 2102212464, %v55
  %v68 = vshrl.u32 920167782, %v56
  %v69 = vor.u32 %v67, %v68
  %v70 = vshll.u32 920167782, %v55
  %v71 = vshrl.u32 1326507024, %v56
  %v72 = vor.u32 %v70, %v71
  %vm73 = vcmp.lt.s32.totalorder %v54, 1
  %vm74 = vcmp.lt.s32.totalorder %v54, 2
  %vm75 = vcmp.lt.s32.totalorder %v54, 3
  %vm76 = vcmp.lt.s32.totalorder %v54, 4
  %v77 = vsel %vm73, %v57, %v60
  %v78 = vsel %vm76, %v66, 2102212464
  %v79 = vsel %vm75, %v63, %v78
  %v80 = vsel %vm74, %v77, %v79
  %v81 = vsel %vm73, %v60, %v63
  %v82 = vsel %vm76, %v69, 920167782
  %v83 = vsel %vm75, %v66, %v82
  %v84 = vsel %vm74, %v81, %v83
  %v85 = vsel %vm73, %v63, %v66
  %v86 = vsel %vm76, %v72, 1326507024
  %v87 = vsel %vm75, %v69, %v86
  %v88 = vsel %vm74, %v85, %v87
  %v89 = vshll.u32 %v49, 8
  %v90 = vand.u32 %v89, 65535
  %v91 = vshrl.u32 %v89, 16
  %v92 = vand.u32 %v88, 65535
  %v93 = vshrl.u32 %v88, 16
  %v94 = vmul.u32 %v90, %v92
  %v95 = vmul.u32 %v90, %v93
  %v96 = vmul.u32 %v91, %v92
  %v97 = vmul.u32 %v91, %v93
  %v98 = vshll.u32 %v95, 16
  %v99 = vshrl.u32 %v95, 16
  %v100 = vshll.u32 %v96, 16
  %v101 = vshrl.u32 %v96, 16
  %vm102 = vc.u32 %v94, %v98
  %v103 = vsel %vm102, 1, 0
  %v104 = vadd.s32 %v94, %v98
  %v105 = vadd.s32 %v97, %v103
  %vm106 = vc.u32 %v104, %v100
  %v107 = vsel %vm106, 1, 0
  %v108 = vadd.s32 %v104, %v100
  %v109 = vadd.s32 %v105, %v107
  %v110 = vadd.s32 %v109, %v99
  %v111 = vadd.s32 %v110, %v101
  %v112 = vand.u32 %v89, 65535
  %v113 = vshrl.u32 %v89, 16
  %v114 = vand.u32 %v84, 65535
  %v115 = vshrl.u32 %v84, 16
  %v116 = vmul.u32 %v112, %v114
  %v117 = vmul.u32 %v112, %v115
  %v118 = vmul.u32 %v113, %v114
  %v119 = vmul.u32 %v113, %v115
  %v120 = vshll.u32 %v117, 16
  %v121 = vshrl.u32 %v117, 16
  %v122 = vshll.u32 %v118, 16
  %v123 = vshrl.u32 %v118, 16
  %vm124 = vc.u32 %v116, %v120
  %v125 = vsel %vm124, 1, 0
  %v126 = vadd.s32 %v116, %v120
  %v127 = vadd.s32 %v119, %v125
  %vm128 = vc.u32 %v126, %v122
  %v129 = vsel %vm128, 1, 0
  %v130 = vadd.s32 %v126, %v122
  %v131 = vadd.s32 %v127, %v129
  %v132 = vadd.s32 %v131, %v121
  %v133 = vadd.s32 %v132, %v123
  %v134 = vmul.u32 %v89, %v80
  %v135 = vadd.s32 %v111, %v130
  %vm136 = vc.u32 %v111, %v130
  %v137 = vadd.s32 %v133, 1
  %v138 = vsel %vm136, %v137, %v133
  %v139 = vadd.s32 %v134, %v138
  %v140 = vadd.s32 %v139, 536870912
  %v141 = vshrl.u32 %v140, 30
  %v142 = vshll.u32 %v141, 30
  %v143 = vsub.s32 %v139, %v142
  %vm144 = vcmp.lt.s32.totalorder %v143, 0
  %v145 = vsub.s32 0, %v143
  %v146 = vsel %vm144, %v145, %v143
  %v147 = vclz %v146
  %v148 = vsub.s32 %v147, 2
  %vm149 = vcmp.gt.s32.totalorder 0, %v148
  %v150 = vsel %vm149, 0, %v148
  %v151 = vsub.s32 32, %v150
  %v152 = vshll.u32 %v143, %v150
  %v153 = vshrl.u32 %v135, %v151
  %v154 = vor.u32 %v152, %v153
  %v155 = vsub.s32 4294967266, %v150
  %v156 = vadd.s32 %v155, 127
  %v157 = vshll.u32 %v156, 23
  %v158 = vor.u32 4788187, %v157
  %v159 = vand.u32 2147483647, %v158
  %v161 = vcvt.s32.f32 %v154
  %v162 = vmul.f32 %v161, %v159
  %v163 = vxor.u32 %v162, 2147483648
  %v164 = vsel %vm43, %v163, %v162
  %v165 = vsub.s32 4, %v141
  %v166 = vsel %vm43, %v165, %v141
  %v167 = vsel %vm42, %v40, %v164
  %v168 = vsel %vm42, 0, %v166
  %v169 = vmul.f32 %v167, %v167
  %v170 = vmul.f32 %v169, -0.001358992
  %v171 = vadd.f32 %v170, 0.041655596
  %v172 = vmul.f32 %v169, %v171
  %v173 = vadd.f32 %v172, -0.4999988
  %v174 = vmul.f32 %v169, %v173
  %v175 = vadd.f32 1.0, %v174
  %v176 = vmul.f32 %v167, %v167
  %v177 = vmul.f32 %v176, -0.00019511016
  %v178 = vadd.f32 %v177, 0.008332121
  %v179 = vmul.f32 %v176, %v178
  %v180 = vadd.f32 %v179, -0.16666654
  %v181 = vmul.f32 %v176, %v180
  %v182 = vadd.f32 %v181, 1.0
  %v183 = vmul.f32 %v182, %v167
  %vm184 = vweird.f32 %v40
  %v185 = vadd.s32 %v168, 3
  %v186 = vand.u32 %v185, 3
  %vm187 = vcmp.lt.s32.totalorder %v186, 2
  %vm188 = vcmp.eq.s32.totalorder %v186, 0
  %v189 = vxor.u32 %v183, 2147483648
  %v190 = vsel %vm188, %v175, %v189
  %vm191 = vcmp.eq.s32.totalorder %v186, 2
  %v192 = vxor.u32 %v175, 2147483648
  %v193 = vsel %vm191, %v192, %v183
  %v194 = vsel %vm187, %v190, %v193
  %v195 = vsel %vm184, nan, %v194
  %v196 = vlaneseq
  %v197 = vand.u32 %v196, 127
  %vm198 = vcmp.lt.s32.totalorder %v197, 32
  %v199 = vsel %vm198, 1, 0
  %vm200 = vcmp.eq.s32.totalorder %v199, 1
  %201 = vset.pattern.permute.xlu0 0
  %202 = vperm.xlu0 %201, %v29
  %v203 = vpop.permute.xlu0 %202
  %v205 = vsel %vm200, %v203, 1.0
  %v206 = vld [vmem:[%s0] sm:$0xff]
  %v207 = vmul.f32 %v205, %v206
  %v208 = vld [vmem:[%s1] sm:$0xff]
  %209 = vset.pattern.permute.xlu0 1
  %210 = vperm.xlu0 %209, %v29
  %v211 = vpop.permute.xlu0 %210
  %v213 = vmul.f32 %v211, %v208
  %v214 = vadd.f32 %v207, %v213
  %v215 = vadd.f32 %v214, %v195
  %v216 = vpack.c.bf16 %v215, %v215
  %v217 = vld [vmem:[%s4] sm:$0xf]
  %v218 = vld [vmem:[%s4 + $0x4] sm:$0xf]
  %v219 = vld [vmem:[%s4 + $0x8] sm:$0xf]
  %v220 = vld [vmem:[%s4 + $0xc] sm:$0xf]
  %v221 = vld [vmem:[%s4 + $0x10] sm:$0xf]
  %v222 = vld [vmem:[%s4 + $0x14] sm:$0xf]
  %v223 = vld [vmem:[%s4 + $0x18] sm:$0xf]
  %v224 = vld [vmem:[%s4 + $0x1c] sm:$0xf]
  %v225 = vld [vmem:[%s4 + $0x20] sm:$0xf]
  %v226 = vld [vmem:[%s4 + $0x24] sm:$0xf]
  %v227 = vld [vmem:[%s4 + $0x28] sm:$0xf]
  %v228 = vld [vmem:[%s4 + $0x2c] sm:$0xf]
  %v229 = vld [vmem:[%s4 + $0x30] sm:$0xf]
  %v230 = vld [vmem:[%s4 + $0x34] sm:$0xf]
  %v231 = vld [vmem:[%s4 + $0x38] sm:$0xf]
  %v232 = vld [vmem:[%s4 + $0x3c] sm:$0xf]
  %v233 = vld [vmem:[%s7] sm:$0x1]
  %v234 = vperm.slane %v233, 0
  %v251 = vunpack.c.l.b16 %v217
  %v252 = vunpack.c.l.b16 %v218
  %v253 = vunpack.c.l.b16 %v219
  %v254 = vunpack.c.l.b16 %v220
  %v255 = vunpack.c.l.b16 %v221
  %v256 = vunpack.c.l.b16 %v222
  %v257 = vunpack.c.l.b16 %v223
  %v258 = vunpack.c.l.b16 %v224
  %v259 = vunpack.c.l.b16 %v225
  %v260 = vunpack.c.l.b16 %v226
  %v261 = vunpack.c.l.b16 %v227
  %v262 = vunpack.c.l.b16 %v228
  %v263 = vunpack.c.l.b16 %v229
  %v264 = vunpack.c.l.b16 %v230
  %v265 = vunpack.c.l.b16 %v231
  %v266 = vunpack.c.l.b16 %v232
  %v267 = vpack.c.b16 %v252, %v251
  %v268 = vpack.c.b16 %v254, %v253
  %v269 = vpack.c.b16 %v256, %v255
  %v270 = vpack.c.b16 %v258, %v257
  %v271 = vpack.c.b16 %v260, %v259
  %v272 = vpack.c.b16 %v262, %v261
  %v273 = vpack.c.b16 %v264, %v263
  %v274 = vpack.c.b16 %v266, %v265
  %283 = vmatpush.bf16.msra.mxu0 %v274
  %284 = vmatpush.bf16.msra.mxu0 %v273
  %285 = vmatpush.bf16.msra.mxu0 %v272
  %286 = vmatpush.bf16.msra.mxu0 %v271
  %287 = vmatpush.bf16.msra.mxu0 %v270
  %288 = vmatpush.bf16.msra.mxu0 %v269
  %289 = vmatpush.bf16.msra.mxu0 %v268
  %290 = vmatpush.bf16.msra.mxu0 %v267
  %291 = vmatmul.bf16.gmra.mxu0 %v216
  %v292 = vpop.f32.mrf.mxu0
  %v293 = vadd.f32 %v234, %v292
  %v294 = vpop.f32.mrf.mxu0
  %295 = vdwg.mxu0
  %v296 = vmax.f32 %v293, 0.0
  %v297 = vpack.c.bf16 %v296, %v296
  %v298 = vld [vmem:[%s5] sm:$0xf]
  %v299 = vld [vmem:[%s5 + $0x4] sm:$0xf]
  %v300 = vld [vmem:[%s5 + $0x8] sm:$0xf]
  %v301 = vld [vmem:[%s5 + $0xc] sm:$0xf]
  %v302 = vld [vmem:[%s5 + $0x10] sm:$0xf]
  %v303 = vld [vmem:[%s5 + $0x14] sm:$0xf]
  %v304 = vld [vmem:[%s5 + $0x18] sm:$0xf]
  %v305 = vld [vmem:[%s5 + $0x1c] sm:$0xf]
  %v306 = vld [vmem:[%s5 + $0x20] sm:$0xf]
  %v307 = vld [vmem:[%s5 + $0x24] sm:$0xf]
  %v308 = vld [vmem:[%s5 + $0x28] sm:$0xf]
  %v309 = vld [vmem:[%s5 + $0x2c] sm:$0xf]
  %v310 = vld [vmem:[%s5 + $0x30] sm:$0xf]
  %v311 = vld [vmem:[%s5 + $0x34] sm:$0xf]
  %v312 = vld [vmem:[%s5 + $0x38] sm:$0xf]
  %v313 = vld [vmem:[%s5 + $0x3c] sm:$0xf]
  %v314 = vld [vmem:[%s7 + $0x1] sm:$0x1]
  %v315 = vperm.slane %v314, 0
  %v332 = vunpack.c.l.b16 %v298
  %v333 = vunpack.c.l.b16 %v299
  %v334 = vunpack.c.l.b16 %v300
  %v335 = vunpack.c.l.b16 %v301
  %v336 = vunpack.c.l.b16 %v302
  %v337 = vunpack.c.l.b16 %v303
  %v338 = vunpack.c.l.b16 %v304
  %v339 = vunpack.c.l.b16 %v305
  %v340 = vunpack.c.l.b16 %v306
  %v341 = vunpack.c.l.b16 %v307
  %v342 = vunpack.c.l.b16 %v308
  %v343 = vunpack.c.l.b16 %v309
  %v344 = vunpack.c.l.b16 %v310
  %v345 = vunpack.c.l.b16 %v311
  %v346 = vunpack.c.l.b16 %v312
  %v347 = vunpack.c.l.b16 %v313
  %v348 = vpack.c.b16 %v333, %v332
  %v349 = vpack.c.b16 %v335, %v334
  %v350 = vpack.c.b16 %v337, %v336
  %v351 = vpack.c.b16 %v339, %v338
  %v352 = vpack.c.b16 %v341, %v340
  %v353 = vpack.c.b16 %v343, %v342
  %v354 = vpack.c.b16 %v345, %v344
  %v355 = vpack.c.b16 %v347, %v346
  %364 = vmatpush.bf16.msra.mxu0 %v355
  %365 = vmatpush.bf16.msra.mxu0 %v354
  %366 = vmatpush.bf16.msra.mxu0 %v353
  %367 = vmatpush.bf16.msra.mxu0 %v352
  %368 = vmatpush.bf16.msra.mxu0 %v351
  %369 = vmatpush.bf16.msra.mxu0 %v350
  %370 = vmatpush.bf16.msra.mxu0 %v349
  %371 = vmatpush.bf16.msra.mxu0 %v348
  %372 = vmatmul.bf16.gmra.mxu0 %v297
  %v373 = vpop.f32.mrf.mxu0
  %v374 = vadd.f32 %v315, %v373
  %v375 = vpop.f32.mrf.mxu0
  %376 = vdwg.mxu0
  %v377 = vmax.f32 %v374, 0.0
  %v378 = vpack.c.bf16 %v377, %v377
  %v379 = vld [vmem:[%s6] sm:$0xf]
  %v380 = vld [vmem:[%s6 + $0x4] sm:$0xf]
  %v381 = vld [vmem:[%s6 + $0x8] sm:$0xf]
  %v382 = vld [vmem:[%s6 + $0xc] sm:$0xf]
  %v383 = vld [vmem:[%s6 + $0x10] sm:$0xf]
  %v384 = vld [vmem:[%s6 + $0x14] sm:$0xf]
  %v385 = vld [vmem:[%s6 + $0x18] sm:$0xf]
  %v386 = vld [vmem:[%s6 + $0x1c] sm:$0xf]
  %v387 = vld [vmem:[%s6 + $0x20] sm:$0xf]
  %v388 = vld [vmem:[%s6 + $0x24] sm:$0xf]
  %v389 = vld [vmem:[%s6 + $0x28] sm:$0xf]
  %v390 = vld [vmem:[%s6 + $0x2c] sm:$0xf]
  %v391 = vld [vmem:[%s6 + $0x30] sm:$0xf]
  %v392 = vld [vmem:[%s6 + $0x34] sm:$0xf]
  %v393 = vld [vmem:[%s6 + $0x38] sm:$0xf]
  %v394 = vld [vmem:[%s6 + $0x3c] sm:$0xf]
  %v395 = vld [vmem:[%s7 + $0x2] sm:$0x1]
  %v396 = vperm.slane %v395, 0
  %v413 = vunpack.c.l.b16 %v379
  %v414 = vunpack.c.l.b16 %v380
  %v415 = vunpack.c.l.b16 %v381
  %v416 = vunpack.c.l.b16 %v382
  %v417 = vunpack.c.l.b16 %v383
  %v418 = vunpack.c.l.b16 %v384
  %v419 = vunpack.c.l.b16 %v385
  %v420 = vunpack.c.l.b16 %v386
  %v421 = vunpack.c.l.b16 %v387
  %v422 = vunpack.c.l.b16 %v388
  %v423 = vunpack.c.l.b16 %v389
  %v424 = vunpack.c.l.b16 %v390
  %v425 = vunpack.c.l.b16 %v391
  %v426 = vunpack.c.l.b16 %v392
  %v427 = vunpack.c.l.b16 %v393
  %v428 = vunpack.c.l.b16 %v394
  %v429 = vpack.c.b16 %v414, %v413
  %v430 = vpack.c.b16 %v416, %v415
  %v431 = vpack.c.b16 %v418, %v417
  %v432 = vpack.c.b16 %v420, %v419
  %v433 = vpack.c.b16 %v422, %v421
  %v434 = vpack.c.b16 %v424, %v423
  %v435 = vpack.c.b16 %v426, %v425
  %v436 = vpack.c.b16 %v428, %v427
  %445 = vmatpush.bf16.msra.mxu0 %v436
  %446 = vmatpush.bf16.msra.mxu0 %v435
  %447 = vmatpush.bf16.msra.mxu0 %v434
  %448 = vmatpush.bf16.msra.mxu0 %v433
  %449 = vmatpush.bf16.msra.mxu0 %v432
  %450 = vmatpush.bf16.msra.mxu0 %v431
  %451 = vmatpush.bf16.msra.mxu0 %v430
  %452 = vmatpush.bf16.msra.mxu0 %v429
  %453 = vmatmul.bf16.gmra.mxu0 %v378
  %v454 = vpop.f32.mrf.mxu0
  %v455 = vadd.f32 %v396, %v454
  %v456 = vpop.f32.mrf.mxu0
  %457 = vdwg.mxu0
  %458 = vst [vmem:[%s8] sm:$0xff] %v455
  // Predicated region
  $region34: #{_forward.1} parent=0 // pred_check
    _
  $region35: #{_forward.1} parent=0 // pred_check_branch
    %460 = sbr.rel (0) target = $region37
  $region36: #{_forward.1} parent=0 // pred_region
    _
  $region37: #{_forward.1} parent=0 // pred_fallthru
    _
  // Predicated region
  $region38: #{_forward.1} parent=0 // pred_check
    _
  $region39: #{_forward.1} parent=0 // pred_check_branch
    %462 = sbr.rel (0) target = $region41
  $region40: #{_forward.1} parent=0 // pred_region
    _
  $region41: #{_forward.1} parent=0 // pred_fallthru
    _

</llo_original>
